<compile_context>
chip_gen: v5e
topology: v5e:2x2
jax: 0.10.0
libtpu: 0.0.40
codegen_flags: <defaults>
</compile_context>

<pallas_src>
import functools

import jax
import jax.numpy as jnp
from jax import lax
from jax.experimental import pallas as pl
from jax.experimental.pallas import tpu as pltpu


def _round_up(x, m):
    return (x + m - 1) // m * m


def _dls_attn_kernel(len_ref,     # (Bt, 1, 1)  int32 VMEM  (ragged lengths)
                     enc_ref,     # (Bt, n, D)  f32   VMEM  (D = padded 2*nhid)
                     bias_ref,    # (Bt, 1, da) f32   VMEM  (cat_emb @ W1b^T)
                     w1_ref,      # (da, D)     f32   VMEM  (W1a, padded)
                     w2_ref,      # (r, da)     f32   VMEM
                     m_ref,       # out: (Bt, r, D)  f32
                     a_ref,       # out: (Bt, r, n)  f32
                     *, inv_temp, mxu_dtype):
    Bt, n, d = enc_ref.shape
    r, da = w2_ref.shape

    H = enc_ref[...]                              # (Bt, n, d) f32
    Hm = H.astype(mxu_dtype)
    W1 = w1_ref[...].astype(mxu_dtype)            # (da, d)
    W2 = w2_ref[...].astype(mxu_dtype)            # (r, da)

    # s1 = H @ W1a^T + (cat_emb @ W1b^T)  -> (Bt, n, da)
    # Flatten the batch tile into the MXU M dimension (Bt*n rows).
    s1 = lax.dot_general(Hm.reshape(Bt * n, d), W1,
                         (((1,), (1,)), ((), ())),
                         preferred_element_type=jnp.float32)
    s1 = s1.reshape(Bt, n, da) + bias_ref[...]    # broadcast over seq axis

    t = jnp.tanh(s1).astype(mxu_dtype)            # (Bt, n, da)

    # scores directly in (Bt, r, n): lane-dense along n, no transpose needed.
    scores = lax.dot_general(jnp.broadcast_to(W2, (Bt, r, da)), t,
                             (((2,), (2,)), ((0,), (0,))),
                             preferred_element_type=jnp.float32)
    scores = scores * inv_temp                    # (Bt, r, n)

    # Ragged-length mask + numerically safe softmax (handles L == 0 and the
    # zero-length batch-padding rows): finite mask value + clamped denominator.
    pos = lax.broadcasted_iota(jnp.int32, (Bt, r, n), 2)
    lens = jnp.broadcast_to(len_ref[...], (Bt, r, n))
    valid = pos < lens
    scores = jnp.where(valid, scores, jnp.float32(-1e30))
    mx = jnp.max(scores, axis=2, keepdims=True)
    e = jnp.where(valid, jnp.exp(scores - mx), 0.0)
    denom = jnp.maximum(jnp.sum(e, axis=2, keepdims=True), jnp.float32(1e-30))
    A = e * pl.reciprocal(denom, approx=True)     # (Bt, r, n), f32

    # M = A @ H ; masked A has exact zeros past each length (and padded feature
    # columns of H are zero), so the full-size batched dot is exact.
    M = lax.dot_general(A.astype(mxu_dtype), Hm,
                        (((2,), (1,)), ((0,), (0,))),
                        preferred_element_type=jnp.float32)   # (Bt, r, d)

    m_ref[...] = M
    a_ref[...] = A


def document_level_self_attention(encoder_outputs, cat_emb, encoder_lengths,
                                  w1, w2, temp=1.0, *,
                                  block_b=8, mxu_dtype=jnp.float32):
    """encoder_outputs: (B, n, 2*nhid) f32
       cat_emb:         (B, 1, C)      f32
       encoder_lengths: (B,)           int32
       w1: (da, 2*nhid + C)   w2: (r, da)
       mxu_dtype: operand dtype fed to the MXU (f32, or bf16 on v6e/v7x);
                  accumulation and softmax math stay f32.
       returns: BM (B, r*2*nhid), weights (B, r, n) zero-padded past lengths."""
    B, n, twoD = encoder_outputs.shape
    C = cat_emb.shape[-1]
    da = w1.shape[0]
    r = w2.shape[0]

    w1a = w1[:, :twoD].astype(jnp.float32)        # acts on encoder outputs
    w1b = w1[:, twoD:].astype(jnp.float32)        # acts on the category embedding

    # Hoist the degenerate (1, C) x (C, da) matmul out of the kernel: one
    # batched XLA GEMM instead of B tiny MXU pushes inside the serialized grid.
    bias = jnp.einsum('boc,dc->bod', cat_emb.astype(jnp.float32), w1b)  # (B,1,da)

    # Batch tile and lane padding (dense vst stores, aligned reshapes).
    Bt = max(1, min(int(block_b), B))
    B_p = _round_up(B, Bt)
    n_p = _round_up(n, 128)
    d_p = _round_up(twoD, 128)

    enc = jnp.pad(encoder_outputs.astype(jnp.float32),
                  ((0, B_p - B), (0, n_p - n), (0, d_p - twoD)))
    bias = jnp.pad(bias, ((0, B_p - B), (0, 0), (0, 0)))
    lens = jnp.pad(encoder_lengths.astype(jnp.int32).reshape(B, 1, 1),
                   ((0, B_p - B), (0, 0), (0, 0)))      # padded rows: length 0
    w1a_p = jnp.pad(w1a, ((0, 0), (0, d_p - twoD)))

    kernel = functools.partial(_dls_attn_kernel,
                               inv_temp=float(1.0 / temp),
                               mxu_dtype=mxu_dtype)

    grid_spec = pltpu.PrefetchScalarGridSpec(
        num_scalar_prefetch=0,
        grid=(B_p // Bt,),
        in_specs=[
            pl.BlockSpec((Bt, 1, 1),     lambda b: (b, 0, 0)),   # lengths
            pl.BlockSpec((Bt, n_p, d_p), lambda b: (b, 0, 0)),   # encoder outputs
            pl.BlockSpec((Bt, 1, da),    lambda b: (b, 0, 0)),   # cat bias
            pl.BlockSpec((da, d_p),      lambda b: (0, 0)),      # W1a
            pl.BlockSpec((r, da),        lambda b: (0, 0)),      # W2
        ],
        out_specs=[
            pl.BlockSpec((Bt, r, d_p),   lambda b: (b, 0, 0)),   # M
            pl.BlockSpec((Bt, r, n_p),   lambda b: (b, 0, 0)),   # A
        ],
    )

    M, A = pl.pallas_call(
        kernel,
        out_shape=(jax.ShapeDtypeStruct((B_p, r, d_p), jnp.float32),
                   jax.ShapeDtypeStruct((B_p, r, n_p), jnp.float32)),
        grid_spec=grid_spec,
        compiler_params=pltpu.CompilerParams(
            dimension_semantics=("parallel",),        # batch is independent
            vmem_limit_bytes=32 * 1024 * 1024),
    )(lens, enc, bias, w1a_p, w2.astype(jnp.float32))

    BM = M[:B, :, :twoD].reshape(B, r * twoD)
    A_out = A[:B, :, :n]
    return BM, A_out


def _reference(encoder_outputs, cat_emb, encoder_lengths, w1, w2, temp=1.0):
    """Pure-JAX port of the PyTorch forward (per-example python loop)."""
    B, n, twoD = encoder_outputs.shape
    C = cat_emb.shape[-1]
    r = w2.shape[0]
    HV = jnp.concatenate(
        [encoder_outputs, jnp.broadcast_to(cat_emb, (B, n, C))], axis=2)
    BM = []
    weights = []
    for i in range(B):
        L = int(encoder_lengths[i])
        if L == 0:
            BM.append(jnp.zeros((r * twoD,), jnp.float32))
            weights.append(jnp.zeros((r, 0), jnp.float32))
            continue
        Horig = encoder_outputs[i, :L, :]
        H = HV[i, :L, :]
        s1 = H @ w1.T
        s2 = jnp.tanh(s1) @ w2.T
        A = jax.nn.softmax(s2.T / temp, axis=1)     # (r, L)
        M = A @ Horig                               # (r, 2D)
        BM.append(M.reshape(-1))
        weights.append(A)
    return jnp.stack(BM, axis=0), weights


if __name__ == "__main__":
    # Small shapes consistent with the module's forward.
    B = 3          # batch (includes a zero-length document)
    n = 16         # max sequence length
    nhid = 16      # encoder hidden dim
    mult = 2       # use_rnn=True -> bidirectional factor
    twoD = nhid * mult
    cat_dim = 8    # category embedding dim
    da = 16        # S1 hidden dim
    r = 8          # number of attention hops
    temp = 1.0

    key = jax.random.PRNGKey(0)
    k_enc, k_cat, k_w1, k_w2 = jax.random.split(key, 4)

    encoder_outputs = jax.random.normal(k_enc, (B, n, twoD), dtype=jnp.float32)
    cat_emb = jax.random.normal(k_cat, (B, 1, cat_dim), dtype=jnp.float32)
    encoder_lengths = jnp.array([n, 11, 0], dtype=jnp.int32)

    # nn.Linear weights, init like init_weights(): uniform(-0.1, 0.1)
    w1 = jax.random.uniform(k_w1, (da, twoD + cat_dim),
                            minval=-0.1, maxval=0.1, dtype=jnp.float32)
    w2 = jax.random.uniform(k_w2, (r, da),
                            minval=-0.1, maxval=0.1, dtype=jnp.float32)

    BM_ref, weights_ref = _reference(
        encoder_outputs, cat_emb, encoder_lengths, w1, w2, temp)

    # f32 MXU path (tight check) and bf16 MXU path (v6e/v7x recommendation).
    for dtype, tol in ((jnp.float32, 5e-3), (jnp.bfloat16, 3e-2)):
        BM, A = document_level_self_attention(
            encoder_outputs, cat_emb, encoder_lengths, w1, w2, temp,
            block_b=2, mxu_dtype=dtype)
        BM = jax.block_until_ready(BM)
        A = jax.block_until_ready(A)

        assert BM.shape == (B, r * twoD)
        assert A.shape == (B, r, n)
        assert jnp.allclose(BM, BM_ref, atol=tol, rtol=tol), \
            f"BM mismatch (mxu_dtype={dtype})"
        for i in range(B):
            L = int(encoder_lengths[i])
            if L > 0:
                assert jnp.allclose(A[i, :, :L], weights_ref[i],
                                    atol=tol, rtol=tol), \
                    f"attention weights mismatch, example {i} (mxu_dtype={dtype})"
            assert jnp.allclose(A[i, :, L:], 0.0), \
                f"padding of weights not zero, example {i} (mxu_dtype={dtype})"

    print("KERNEL_OK")
</pallas_src>

<mosaic_0001>
module attributes {stable_mosaic.version = 11 : i64} {
  func.func @_dls_attn_kernel(%arg0: i32, %arg1: memref<2x1x1xi32, #tpu.memory_space<vmem>>, %arg2: memref<2x128x128xf32, #tpu.memory_space<vmem>>, %arg3: memref<2x1x16xf32, #tpu.memory_space<vmem>>, %arg4: memref<16x128xf32, #tpu.memory_space<vmem>>, %arg5: memref<8x16xf32, #tpu.memory_space<vmem>>, %arg6: memref<2x8x128xf32, #tpu.memory_space<vmem>>, %arg7: memref<2x8x128xf32, #tpu.memory_space<vmem>>) attributes {dimension_semantics = [#tpu.dimension_semantics<parallel>], iteration_bounds = array<i64: 2>, scalar_prefetch = 0 : i64, scratch_operands = 0 : i64, tpu.core_type = #tpu.core_type<tc>, window_params = [{transform_indices = @transform_0, window_bounds = array<i64: 2, 1, 1>}, {transform_indices = @transform_1, window_bounds = array<i64: 2, 128, 128>}, {transform_indices = @transform_2, window_bounds = array<i64: 2, 1, 16>}, {pipeline_mode = #tpu.pipeline_mode<synchronous>, transform_indices = @transform_3, window_bounds = array<i64: 16, 128>}, {pipeline_mode = #tpu.pipeline_mode<synchronous>, transform_indices = @transform_4, window_bounds = array<i64: 8, 16>}, {transform_indices = @transform_5, window_bounds = array<i64: 2, 8, 128>}, {transform_indices = @transform_6, window_bounds = array<i64: 2, 8, 128>}]} {
    %c0 = arith.constant 0 : index
    %c0_0 = arith.constant 0 : index
    %c0_1 = arith.constant 0 : index
    %0 = vector.load %arg2[%c0, %c0_0, %c0_1] : memref<2x128x128xf32, #tpu.memory_space<vmem>>, vector<2x128x128xf32>
    %c0_2 = arith.constant 0 : index
    %c0_3 = arith.constant 0 : index
    %1 = vector.load %arg4[%c0_2, %c0_3] : memref<16x128xf32, #tpu.memory_space<vmem>>, vector<16x128xf32>
    %c0_4 = arith.constant 0 : index
    %c0_5 = arith.constant 0 : index
    %2 = vector.load %arg5[%c0_4, %c0_5] : memref<8x16xf32, #tpu.memory_space<vmem>>, vector<8x16xf32>
    %3 = vector.shape_cast %0 : vector<2x128x128xf32> to vector<256x128xf32>
    %cst = arith.constant dense<0.000000e+00> : vector<256x16xf32>
    %4 = tpu.matmul %3, %1, %cst {dimension_numbers = #tpu.dot_dimension_numbers<[1], [1], [0], [0], [0, 0, 1, 0], [], []>} : vector<256x128xf32>, vector<16x128xf32>, vector<256x16xf32> -> vector<256x16xf32>
    %5 = vector.shape_cast %4 : vector<256x16xf32> to vector<2x128x16xf32>
    %c0_6 = arith.constant 0 : index
    %c0_7 = arith.constant 0 : index
    %c0_8 = arith.constant 0 : index
    %6 = vector.load %arg3[%c0_6, %c0_7, %c0_8] : memref<2x1x16xf32, #tpu.memory_space<vmem>>, vector<2x1x16xf32>
    %7 = vector.broadcast %6 : vector<2x1x16xf32> to vector<2x128x16xf32>
    %8 = arith.addf %5, %7 : vector<2x128x16xf32>
    %9 = math.tanh %8 : vector<2x128x16xf32>
    %10 = vector.shape_cast %2 : vector<8x16xf32> to vector<1x8x16xf32>
    %11 = vector.broadcast %10 : vector<1x8x16xf32> to vector<2x8x16xf32>
    %cst_9 = arith.constant dense<0.000000e+00> : vector<2x8x128xf32>
    %12 = tpu.matmul %11, %9, %cst_9 {dimension_numbers = #tpu.dot_dimension_numbers<[2], [2], [1], [1], [0, 0, 0, 1, 1, 1], [0], [0]>} : vector<2x8x16xf32>, vector<2x128x16xf32>, vector<2x8x128xf32> -> vector<2x8x128xf32>
    %cst_10 = arith.constant 1.000000e+00 : f32
    %13 = vector.broadcast %cst_10 : f32 to vector<2x8x128xf32>
    %14 = arith.mulf %12, %13 : vector<2x8x128xf32>
    %15 = tpu.iota {dimensions = array<i32: 2>} : vector<2x8x128xi32>
    %c0_11 = arith.constant 0 : index
    %c0_12 = arith.constant 0 : index
    %c0_13 = arith.constant 0 : index
    %16 = vector.load %arg1[%c0_11, %c0_12, %c0_13] : memref<2x1x1xi32, #tpu.memory_space<vmem>>, vector<2x1x1xi32>
    %17 = vector.shape_cast %16 : vector<2x1x1xi32> to vector<2x1x1xi32>
    %18 = vector.broadcast %17 : vector<2x1x1xi32> to vector<2x8x128xi32>
    %19 = arith.cmpi slt, %15, %18 : vector<2x8x128xi32>
    %cst_14 = arith.constant -1.000000e+30 : f32
    %20 = vector.broadcast %cst_14 : f32 to vector<2x8x128xf32>
    %21 = arith.select %19, %14, %20 : vector<2x8x128xi1>, vector<2x8x128xf32>
    %cst_15 = arith.constant dense<0xFF800000> : vector<2x8xf32>
    %22 = vector.multi_reduction <maximumf>, %21, %cst_15 [2] : vector<2x8x128xf32> to vector<2x8xf32>
    %23 = vector.shape_cast %22 : vector<2x8xf32> to vector<2x8x1xf32>
    %24 = vector.broadcast %23 : vector<2x8x1xf32> to vector<2x8x128xf32>
    %25 = arith.subf %21, %24 : vector<2x8x128xf32>
    %26 = math.exp %25 : vector<2x8x128xf32>
    %cst_16 = arith.constant 0.000000e+00 : f32
    %27 = vector.broadcast %cst_16 : f32 to vector<2x8x128xf32>
    %28 = arith.select %19, %26, %27 : vector<2x8x128xi1>, vector<2x8x128xf32>
    %cst_17 = arith.constant dense<0.000000e+00> : vector<2x8xf32>
    %29 = vector.multi_reduction <add>, %28, %cst_17 [2] : vector<2x8x128xf32> to vector<2x8xf32>
    %30 = vector.shape_cast %29 : vector<2x8xf32> to vector<2x8x1xf32>
    %cst_18 = arith.constant 1.000000e-30 : f32
    %31 = vector.broadcast %cst_18 : f32 to vector<2x8x1xf32>
    %32 = arith.maximumf %30, %31 : vector<2x8x1xf32>
    %33 = tpu.reciprocal %32 {approx = true} : vector<2x8x1xf32> -> vector<2x8x1xf32>
    %34 = vector.broadcast %33 : vector<2x8x1xf32> to vector<2x8x128xf32>
    %35 = arith.mulf %28, %34 : vector<2x8x128xf32>
    %cst_19 = arith.constant dense<0.000000e+00> : vector<2x8x128xf32>
    %36 = tpu.matmul %35, %0, %cst_19 {dimension_numbers = #tpu.dot_dimension_numbers<[2], [1], [1], [2], [0, 0, 0, 1, 1, 2], [0], [0]>} : vector<2x8x128xf32>, vector<2x128x128xf32>, vector<2x8x128xf32> -> vector<2x8x128xf32>
    %c0_20 = arith.constant 0 : index
    %c0_21 = arith.constant 0 : index
    %c0_22 = arith.constant 0 : index
    %37 = vector.load %arg6[%c0_20, %c0_21, %c0_22] : memref<2x8x128xf32, #tpu.memory_space<vmem>>, vector<2x8x128xf32>
    tpu.vector_store %arg6[%c0_20, %c0_21, %c0_22], %36 {strides = array<i32>} : memref<2x8x128xf32, #tpu.memory_space<vmem>>, vector<2x8x128xf32>,
    %c0_23 = arith.constant 0 : index
    %c0_24 = arith.constant 0 : index
    %c0_25 = arith.constant 0 : index
    %38 = vector.load %arg7[%c0_23, %c0_24, %c0_25] : memref<2x8x128xf32, #tpu.memory_space<vmem>>, vector<2x8x128xf32>
    tpu.vector_store %arg7[%c0_23, %c0_24, %c0_25], %35 {strides = array<i32>} : memref<2x8x128xf32, #tpu.memory_space<vmem>>, vector<2x8x128xf32>,
    return
  }
  func.func @transform_0(%arg0: i32) -> (i32, i32, i32) {
    %c0_i32 = arith.constant 0 : i32
    %c0_i32_0 = arith.constant 0 : i32
    %c0_i32_1 = arith.constant 0 : i32
    return %arg0, %c0_i32, %c0_i32_0 : i32, i32, i32
  }
  func.func @transform_1(%arg0: i32) -> (i32, i32, i32) {
    %c0_i32 = arith.constant 0 : i32
    %c0_i32_0 = arith.constant 0 : i32
    %c0_i32_1 = arith.constant 0 : i32
    return %arg0, %c0_i32, %c0_i32_0 : i32, i32, i32
  }
  func.func @transform_2(%arg0: i32) -> (i32, i32, i32) {
    %c0_i32 = arith.constant 0 : i32
    %c0_i32_0 = arith.constant 0 : i32
    %c0_i32_1 = arith.constant 0 : i32
    return %arg0, %c0_i32, %c0_i32_0 : i32, i32, i32
  }
  func.func @transform_3(%arg0: i32) -> (i32, i32) {
    %c0_i32 = arith.constant 0 : i32
    %c0_i32_0 = arith.constant 0 : i32
    %c0_i32_1 = arith.constant 0 : i32
    return %c0_i32, %c0_i32_0 : i32, i32
  }
  func.func @transform_4(%arg0: i32) -> (i32, i32) {
    %c0_i32 = arith.constant 0 : i32
    %c0_i32_0 = arith.constant 0 : i32
    %c0_i32_1 = arith.constant 0 : i32
    return %c0_i32, %c0_i32_0 : i32, i32
  }
  func.func @transform_5(%arg0: i32) -> (i32, i32, i32) {
    %c0_i32 = arith.constant 0 : i32
    %c0_i32_0 = arith.constant 0 : i32
    %c0_i32_1 = arith.constant 0 : i32
    return %arg0, %c0_i32, %c0_i32_0 : i32, i32, i32
  }
  func.func @transform_6(%arg0: i32) -> (i32, i32, i32) {
    %c0_i32 = arith.constant 0 : i32
    %c0_i32_0 = arith.constant 0 : i32
    %c0_i32_1 = arith.constant 0 : i32
    return %arg0, %c0_i32, %c0_i32_0 : i32, i32, i32
  }
}

</mosaic_0001>

<llo_original>
// kernel: tpu_custom_call.1
$region0: #{tpu_custom_call.1}
  #allocation0 [shape = 'u32[]', space=smem, size = 0x4, offset = 0x4, fixed_abs, tag = 'smem constant byte address 0x4 - core index']
  #allocation1 [shape = 'u32[72,128]{1,0:T(1,128)}', space=vmem, size = 0x9000, scoped, tag = 'internal scratch']
  %s0 = inlined_call_operand.vmem [shape: s32[4,1,1], index: 0, kind: input, shape index: {}]
  %s1 = inlined_call_operand.hbm [shape: f32[4,128,128], index: 1, kind: input, shape index: {}]
  %s2 = inlined_call_operand.hbm [shape: f32[4,1,16], index: 2, kind: input, shape index: {}]
  %s3 = inlined_call_operand.hbm [shape: f32[16,128], index: 3, kind: input, shape index: {}]
  %s4 = inlined_call_operand.vmem [shape: f32[8,16], index: 4, kind: input, shape index: {}]
  %s5 = inlined_call_operand.hbm [shape: f32[4,8,128], index: 5, kind: output, shape index: {0}]
  %s6 = inlined_call_operand.hbm [shape: f32[4,8,128], index: 6, kind: output, shape index: {1}]
  %7 = xla_tuple %s5, %s6
  %s8 = sld [smem:[#allocation0]]
  $region73: #{tpu_custom_call.1} parent=0
    _
  %s10 = ssub.s32 1, %s8
  %s11 = scalar_select 0, %s10, %s8
  $region1: #{tpu_custom_call.1} parent=0
    #allocation2 [shape = 'u8[262144]{0}', space=vmem, size = 0x40000, scoped, tag = 'input window, operand 1']
    #allocation3 [shape = 's32[2]{0}', space=sflag, size = 0x8, scoped, tag = 'scoped memory for tpu_custom_call.1']
    #allocation4 [shape = 's32[2]{0}', space=sflag, size = 0x8, scoped, tag = 'scoped memory for tpu_custom_call.1']
    #allocation5 [shape = 'u8[2048]{0}', space=vmem, size = 0x800, scoped, tag = 'input window, operand 2']
    #allocation6 [shape = 's32[2]{0}', space=sflag, size = 0x8, scoped, tag = 'scoped memory for tpu_custom_call.1']
    #allocation7 [shape = 'u8[8192]{0}', space=vmem, size = 0x2000, scoped, tag = 'input window, operand 3, single buffered']
    #allocation8 [shape = 'u8[16384]{0}', space=vmem, size = 0x4000, scoped, tag = 'output window, operand 0']
    #allocation9 [shape = 'u8[16384]{0}', space=vmem, size = 0x4000, scoped, tag = 'output window, operand 1']
    #allocation10 [shape = 's32[2]{0}', space=sflag, size = 0x8, scoped, tag = 'scoped memory for tpu_custom_call.1']
    %12 = vsyncpa [#allocation3], 0
    %s13 = scalar_lea.sflag [#allocation3], 1
    %14 = vsyncpa %s13, 0
    %15 = vsyncpa [#allocation6], 0
    %s16 = scalar_lea.sflag [#allocation6], 1
    %17 = vsyncpa %s16, 0
    %18 = vsyncpa [#allocation4], 0
    %s19 = scalar_lea.sflag [#allocation4], 1
    %20 = vsyncpa %s19, 0
    %21 = vsyncpa [#allocation10], 0
    %s22 = scalar_lea.sflag [#allocation10], 1
    %23 = vsyncpa %s22, 0
    loop: start=0, step=1, limit=4
    $region2: #{tpu_custom_call.1} parent=1 // loop_pre_header
      _
    $region3: #{tpu_custom_call.1} parent=1 // loop_header
      %s25 = sphi 0, %s29
      %p26 = scmp.ge.s32.totalorder %s25, 4
      %s35 = sphi 0, %s37
      %s38 = sphi 0, %s35
      %s39 = sphi 0, %s38
      %s55 = sphi 0, %s39
      %s61 = sphi 0, %s63
      %s64 = sphi 0, %s61
      %s65 = sphi 0, %s64
      %s81 = sphi 0, %s65
      %s87 = sphi 0, %s89
      %s90 = sphi 0, %s87
      %s91 = sphi 0, %s90
      %s107 = sphi 0, %s91
      %s111 = sphi 0, %s111
      %s113 = sphi 0, %s111
      %s114 = sphi 0, %s113
      %s128 = sphi 0, %s114
      %s132 = sphi 0, %s132
      %s134 = sphi 0, %s132
      %s135 = sphi 0, %s134
      %s149 = sphi 0, %s135
      %s155 = sphi 0, %s157
      %s158 = sphi 0, %s155
      %s159 = sphi 0, %s158
      %s175 = sphi 0, %s159
      %s181 = sphi 0, %s183
      %s184 = sphi 0, %s181
      %s185 = sphi 0, %s184
      %s201 = sphi 0, %s185
    $region4: #{tpu_custom_call.1} parent=1 // loop_header_branch
      %28 = sbr.rel (%p26) target = $region8
    $region5: #{tpu_custom_call.1} parent=1 // loop_body
      %s30 = ssub.s32 %s25, 1
      %s31 = ssub.s32 %s25, 2
      %s32 = sadd.s32 %s25, 1
      %s33 = ssub.s32 %s25, %s32
      %p34 = scmp.eq.s32.totalorder %s33, 0
      %s36 = sadd.s32 %s35, 1
      %s37 = scalar_select %p34, %s35, %s36
      %p40 = pneg %p34
      %p41 = scmp.eq.s32.totalorder %s25, 1
      %p42 = por %p40, %p41
      %p43 = scmp.ne.s32.totalorder %s35, %s38
      %p44 = scmp.eq.s32.totalorder %s25, 0
      %p45 = por %p43, %p44
      %p46 = scmp.ne.s32.totalorder %s35, %s38
      %p47 = scmp.eq.s32.totalorder %s30, 1
      %p48 = por %p46, %p47
      %p49 = scmp.ne.s32.totalorder %s38, %s39
      %p50 = scmp.eq.s32.totalorder %s30, 0
      %p51 = por %p49, %p50
      %p52 = scmp.ne.s32.totalorder %s38, %s39
      %p53 = scmp.eq.s32.totalorder %s31, 1
      %p54 = por %p52, %p53
      %p56 = scmp.ne.s32.totalorder %s39, %s55
      %p57 = scmp.eq.s32.totalorder %s31, 0
      %p58 = por %p56, %p57
      %s59 = ssub.s32 %s25, %s32
      %p60 = scmp.eq.s32.totalorder %s59, 0
      %s62 = sadd.s32 %s61, 1
      %s63 = scalar_select %p60, %s61, %s62
      %p66 = pneg %p60
      %p67 = scmp.eq.s32.totalorder %s25, 1
      %p68 = por %p66, %p67
      %p69 = scmp.ne.s32.totalorder %s61, %s64
      %p70 = scmp.eq.s32.totalorder %s25, 0
      %p71 = por %p69, %p70
      %p72 = scmp.ne.s32.totalorder %s61, %s64
      %p73 = scmp.eq.s32.totalorder %s30, 1
      %p74 = por %p72, %p73
      %p75 = scmp.ne.s32.totalorder %s64, %s65
      %p76 = scmp.eq.s32.totalorder %s30, 0
      %p77 = por %p75, %p76
      %p78 = scmp.ne.s32.totalorder %s64, %s65
      %p79 = scmp.eq.s32.totalorder %s31, 1
      %p80 = por %p78, %p79
      %p82 = scmp.ne.s32.totalorder %s65, %s81
      %p83 = scmp.eq.s32.totalorder %s31, 0
      %p84 = por %p82, %p83
      %s85 = ssub.s32 %s25, %s32
      %p86 = scmp.eq.s32.totalorder %s85, 0
      %s88 = sadd.s32 %s87, 1
      %s89 = scalar_select %p86, %s87, %s88
      %p92 = pneg %p86
      %p93 = scmp.eq.s32.totalorder %s25, 1
      %p94 = por %p92, %p93
      %p95 = scmp.ne.s32.totalorder %s87, %s90
      %p96 = scmp.eq.s32.totalorder %s25, 0
      %p97 = por %p95, %p96
      %p98 = scmp.ne.s32.totalorder %s87, %s90
      %p99 = scmp.eq.s32.totalorder %s30, 1
      %p100 = por %p98, %p99
      %p101 = scmp.ne.s32.totalorder %s90, %s91
      %p102 = scmp.eq.s32.totalorder %s30, 0
      %p103 = por %p101, %p102
      %p104 = scmp.ne.s32.totalorder %s90, %s91
      %p105 = scmp.eq.s32.totalorder %s31, 1
      %p106 = por %p104, %p105
      %p108 = scmp.ne.s32.totalorder %s91, %s107
      %p109 = scmp.eq.s32.totalorder %s31, 0
      %p110 = por %p108, %p109
      %s112 = sadd.s32 %s111, 1
      %p115 = scmp.eq.s32.totalorder %s25, 1
      %p116 = scmp.ne.s32.totalorder %s111, %s113
      %p117 = scmp.eq.s32.totalorder %s25, 0
      %p118 = por %p116, %p117
      %p119 = scmp.ne.s32.totalorder %s111, %s113
      %p120 = scmp.eq.s32.totalorder %s30, 1
      %p121 = por %p119, %p120
      %p122 = scmp.ne.s32.totalorder %s113, %s114
      %p123 = scmp.eq.s32.totalorder %s30, 0
      %p124 = por %p122, %p123
      %p125 = scmp.ne.s32.totalorder %s113, %s114
      %p126 = scmp.eq.s32.totalorder %s31, 1
      %p127 = por %p125, %p126
      %p129 = scmp.ne.s32.totalorder %s114, %s128
      %p130 = scmp.eq.s32.totalorder %s31, 0
      %p131 = por %p129, %p130
      %s133 = sadd.s32 %s132, 1
      %p136 = scmp.eq.s32.totalorder %s25, 1
      %p137 = scmp.ne.s32.totalorder %s132, %s134
      %p138 = scmp.eq.s32.totalorder %s25, 0
      %p139 = por %p137, %p138
      %p140 = scmp.ne.s32.totalorder %s132, %s134
      %p141 = scmp.eq.s32.totalorder %s30, 1
      %p142 = por %p140, %p141
      %p143 = scmp.ne.s32.totalorder %s134, %s135
      %p144 = scmp.eq.s32.totalorder %s30, 0
      %p145 = por %p143, %p144
      %p146 = scmp.ne.s32.totalorder %s134, %s135
      %p147 = scmp.eq.s32.totalorder %s31, 1
      %p148 = por %p146, %p147
      %p150 = scmp.ne.s32.totalorder %s135, %s149
      %p151 = scmp.eq.s32.totalorder %s31, 0
      %p152 = por %p150, %p151
      %s153 = ssub.s32 %s25, %s32
      %p154 = scmp.eq.s32.totalorder %s153, 0
      %s156 = sadd.s32 %s155, 1
      %s157 = scalar_select %p154, %s155, %s156
      %p160 = pneg %p154
      %p161 = scmp.eq.s32.totalorder %s25, 1
      %p162 = por %p160, %p161
      %p163 = scmp.ne.s32.totalorder %s155, %s158
      %p164 = scmp.eq.s32.totalorder %s25, 0
      %p165 = por %p163, %p164
      %p166 = scmp.ne.s32.totalorder %s155, %s158
      %p167 = scmp.eq.s32.totalorder %s30, 1
      %p168 = por %p166, %p167
      %p169 = scmp.ne.s32.totalorder %s158, %s159
      %p170 = scmp.eq.s32.totalorder %s30, 0
      %p171 = por %p169, %p170
      %p172 = scmp.ne.s32.totalorder %s158, %s159
      %p173 = scmp.eq.s32.totalorder %s31, 1
      %p174 = por %p172, %p173
      %p176 = scmp.ne.s32.totalorder %s159, %s175
      %p177 = scmp.eq.s32.totalorder %s31, 0
      %p178 = por %p176, %p177
      %s179 = ssub.s32 %s25, %s32
      %p180 = scmp.eq.s32.totalorder %s179, 0
      %s182 = sadd.s32 %s181, 1
      %s183 = scalar_select %p180, %s181, %s182
      %p186 = pneg %p180
      %p187 = scmp.eq.s32.totalorder %s25, 1
      %p188 = por %p186, %p187
      %p189 = scmp.ne.s32.totalorder %s181, %s184
      %p190 = scmp.eq.s32.totalorder %s25, 0
      %p191 = por %p189, %p190
      %p192 = scmp.ne.s32.totalorder %s181, %s184
      %p193 = scmp.eq.s32.totalorder %s30, 1
      %p194 = por %p192, %p193
      %p195 = scmp.ne.s32.totalorder %s184, %s185
      %p196 = scmp.eq.s32.totalorder %s30, 0
      %p197 = por %p195, %p196
      %p198 = scmp.ne.s32.totalorder %s184, %s185
      %p199 = scmp.eq.s32.totalorder %s31, 1
      %p200 = por %p198, %p199
      %p202 = scmp.ne.s32.totalorder %s185, %s201
      %p203 = scmp.eq.s32.totalorder %s31, 0
      %p204 = por %p202, %p203
      %p205 = scmp.le.s32.totalorder 1, %s25
      %p206 = scmp.lt.s32.totalorder %s25, 3
      %p207 = pnand %p205, %p206
      %p208 = pneg %p207
      // Predicated region
      $region9: #{tpu_custom_call.1} parent=5 // pred_check
        _
      $region10: #{tpu_custom_call.1} parent=5 // pred_check_branch
        %210 = sbr.rel (%p207) target = $region12
      $region11: #{tpu_custom_call.1} parent=5 // pred_region
        %s211 = ssub.s32 %s25, 1
        // Predicated region
        $region13: #{tpu_custom_call.1} parent=11 // pred_check
          %p212 = pneg %p124
        $region14: #{tpu_custom_call.1} parent=11 // pred_check_branch
          %214 = sbr.rel (%p212) target = $region16
        $region15: #{tpu_custom_call.1} parent=11 // pred_region
          %216 = vsyncadd [#allocation6], 0
          %s217 = sshll.u32 %s3, 4
          %s218 = int_to_ptr.hbm [resolvable:$true] %s217
          %s219 = sshll.u32 [#allocation7], 4
          %s220 = int_to_ptr.vmem [resolvable:$true] %s219
          %225 = dma.hbm_to_vmem [thread:$0]  %s218, 256, %s220, [#allocation6], 128, 128, 8
        $region16: #{tpu_custom_call.1} parent=11 // pred_fallthru
          _
        // Predicated region
        $region17: #{tpu_custom_call.1} parent=11 // pred_check
          %p226 = pneg %p145
        $region18: #{tpu_custom_call.1} parent=11 // pred_check_branch
          %228 = sbr.rel (%p226) target = $region20
        $region19: #{tpu_custom_call.1} parent=11 // pred_region
          _
        $region20: #{tpu_custom_call.1} parent=11 // pred_fallthru
          _
      $region12: #{tpu_custom_call.1} parent=5 // pred_fallthru
        _
      %p229 = scmp.lt.s32.totalorder %s25, 2
      // Predicated region
      $region21: #{tpu_custom_call.1} parent=5 // pred_check
        %p230 = pneg %p229
      $region22: #{tpu_custom_call.1} parent=5 // pred_check_branch
        %232 = sbr.rel (%p230) target = $region24
      $region23: #{tpu_custom_call.1} parent=5 // pred_region
        // Predicated region
        $region25: #{tpu_custom_call.1} parent=23 // pred_check
          %p233 = pneg %p45
        $region26: #{tpu_custom_call.1} parent=23 // pred_check_branch
          %235 = sbr.rel (%p233) target = $region28
        $region27: #{tpu_custom_call.1} parent=23 // pred_region
          %s236 = smul.u32 2, %s25
          %p237 = scmp.lt.s32.totalorder %s236, 3
          %s238 = scalar_select %p237, %s236, 3
          %s239 = scalar_lea.vmem %s0, %s238
          %s240 = smul.u32 2, %s25
        $region28: #{tpu_custom_call.1} parent=23 // pred_fallthru
          _
        // Predicated region
        $region29: #{tpu_custom_call.1} parent=23 // pred_check
          %p241 = pneg %p71
        $region30: #{tpu_custom_call.1} parent=23 // pred_check_branch
          %243 = sbr.rel (%p241) target = $region32
        $region31: #{tpu_custom_call.1} parent=23 // pred_region
          %s244 = sand.u32 %s61, 1
          %s245 = scalar_lea.sflag [#allocation3], %s244
          %s246 = sand.u32 %s61, 1
          %s247 = smul.addr %s246, 256
          %s248 = scalar_lea.vmem [#allocation2], %s247
          %s249 = smul.u32 2, %s25
          %251 = vsyncadd %s245, 0
          %s252 = smul.addr %s249, 16
          %s253 = smul.addr %s252, 8
          %s254 = scalar_lea.hbm %s1, %s253
          %s255 = sshll.u32 %s254, 4
          %s256 = int_to_ptr.hbm [resolvable:$true] %s255
          %s257 = sshll.u32 %s248, 4
          %s258 = int_to_ptr.vmem [resolvable:$true] %s257
          %263 = dma.hbm_to_vmem [thread:$0]  %s256, 4096, %s258, %s245, 128, 128, 8
        $region32: #{tpu_custom_call.1} parent=23 // pred_fallthru
          _
        // Predicated region
        $region33: #{tpu_custom_call.1} parent=23 // pred_check
          %p264 = pneg %p97
        $region34: #{tpu_custom_call.1} parent=23 // pred_check_branch
          %266 = sbr.rel (%p264) target = $region36
        $region35: #{tpu_custom_call.1} parent=23 // pred_region
          %s267 = sand.u32 %s25, 1
          %s268 = scalar_lea.sflag [#allocation6], %s267
          %s269 = sand.u32 %s87, 1
          %s270 = smul.addr %s269, 2
          %s271 = scalar_lea.vmem [#allocation5], %s270
          %s272 = smul.u32 2, %s25
          %274 = vsyncadd %s268, 0
          %s275 = scalar_lea.hbm %s2, %s272
          %s276 = sshll.u32 %s275, 4
          %s277 = int_to_ptr.hbm [resolvable:$true] %s276
          %s278 = sshll.u32 %s271, 4
          %s279 = int_to_ptr.vmem [resolvable:$true] %s278
          %284 = dma.hbm_to_vmem [thread:$0]  %s277, 32, %s279, %s268, 16, 16, 1
        $region36: #{tpu_custom_call.1} parent=23 // pred_fallthru
          _
      $region24: #{tpu_custom_call.1} parent=5 // pred_fallthru
        _
      %p285 = scmp.le.s32.totalorder 1, %s25
      %p286 = scmp.lt.s32.totalorder %s25, 3
      %p287 = pnand %p285, %p286
      %p288 = pneg %p287
      // Predicated region
      $region37: #{tpu_custom_call.1} parent=5 // pred_check
        _
      $region38: #{tpu_custom_call.1} parent=5 // pred_check_branch
        %290 = sbr.rel (%p287) target = $region40
      $region39: #{tpu_custom_call.1} parent=5 // pred_region
        %s291 = ssub.s32 %s25, 1
        %s292 = sand.u32 %s64, 1
        %s293 = scalar_lea.sflag [#allocation3], %s292
        %s294 = sand.u32 %s64, 1
        %s295 = smul.addr %s294, 256
        %s296 = scalar_lea.vmem [#allocation2], %s295
        // Predicated region
        $region41: #{tpu_custom_call.1} parent=39 // pred_check
          %p297 = pneg %p77
        $region42: #{tpu_custom_call.1} parent=39 // pred_check_branch
          %299 = sbr.rel (%p297) target = $region44
        $region43: #{tpu_custom_call.1} parent=39 // pred_region
          %301 = dma.done %s293, 4096
        $region44: #{tpu_custom_call.1} parent=39 // pred_fallthru
          _
        %s302 = sand.u32 %s30, 1
        %s303 = scalar_lea.sflag [#allocation6], %s302
        %s304 = sand.u32 %s90, 1
        %s305 = smul.addr %s304, 2
        %s306 = scalar_lea.vmem [#allocation5], %s305
        // Predicated region
        $region45: #{tpu_custom_call.1} parent=39 // pred_check
          %p307 = pneg %p103
        $region46: #{tpu_custom_call.1} parent=39 // pred_check_branch
          %309 = sbr.rel (%p307) target = $region48
        $region47: #{tpu_custom_call.1} parent=39 // pred_region
          %311 = dma.done %s303, 32
        $region48: #{tpu_custom_call.1} parent=39 // pred_fallthru
          _
        // Predicated region
        $region49: #{tpu_custom_call.1} parent=39 // pred_check
          %p312 = pneg %p124
        $region50: #{tpu_custom_call.1} parent=39 // pred_check_branch
          %314 = sbr.rel (%p312) target = $region52
        $region51: #{tpu_custom_call.1} parent=39 // pred_region
          %316 = dma.done [#allocation6], 256
        $region52: #{tpu_custom_call.1} parent=39 // pred_fallthru
          _
        %s317 = smul.u32 2, %s30
        %p318 = scmp.lt.s32.totalorder %s317, 3
        %s319 = scalar_select %p318, %s317, 3
        %s320 = scalar_lea.vmem %s0, %s319
        %p321 = pneg %p51
        %p322 = pneg %p48
        %s323 = sand.u32 %s64, 1
        %s324 = scalar_lea.sflag [#allocation3], %s323
        %s325 = sand.u32 %s64, 1
        %s326 = smul.addr %s325, 256
        %s327 = scalar_lea.vmem [#allocation2], %s326
        %p328 = pneg %p77
        %p329 = pneg %p74
        %s330 = sand.u32 %s30, 1
        %s331 = scalar_lea.sflag [#allocation6], %s330
        %s332 = sand.u32 %s90, 1
        %s333 = smul.addr %s332, 2
        %s334 = scalar_lea.vmem [#allocation5], %s333
        %p335 = pneg %p103
        %p336 = pneg %p100
        %p337 = pneg %p124
        %p338 = pneg %p121
        %p339 = pneg %p145
        %p340 = pneg %p142
        %p341 = pneg %p171
        %p342 = pneg %p168
        %s343 = sand.u32 %s158, 1
        %s344 = scalar_lea.sflag [#allocation4], %s343
        %s345 = sand.u32 %s158, 1
        %s346 = smul.addr %s345, 16
        %s347 = scalar_lea.vmem [#allocation8], %s346
        %p348 = pneg %p197
        %p349 = pneg %p194
        %s350 = sand.u32 %s184, 1
        %s351 = scalar_lea.sflag [#allocation10], %s350
        %s352 = sand.u32 %s184, 1
        %s353 = smul.addr %s352, 16
        %s354 = scalar_lea.vmem [#allocation9], %s353
        %s355 = smul.u32 2, %s30
        %p356 = scmp.lt.s32.totalorder %s355, 3
        %s357 = scalar_select %p356, %s355, 3
        %s358 = scalar_lea.vmem %s0, %s357
        %s359 = smul.u32 2, %s30
        %s360 = smul.u32 2, %s30
        %s361 = smul.u32 2, %s30
        %s362 = smul.u32 2, %s30
        %s363 = smul.u32 2, %s30
        %v364 = vld [vmem:[%s296] sm:$0xff]
        %v365 = vld [vmem:[%s296 + $0x8] sm:$0xff]
        %v366 = vld [vmem:[%s296 + $0x10] sm:$0xff]
        %v367 = vld [vmem:[%s296 + $0x18] sm:$0xff]
        %v368 = vld [vmem:[%s296 + $0x20] sm:$0xff]
        %v369 = vld [vmem:[%s296 + $0x28] sm:$0xff]
        %v370 = vld [vmem:[%s296 + $0x30] sm:$0xff]
        %v371 = vld [vmem:[%s296 + $0x38] sm:$0xff]
        %v372 = vld [vmem:[%s296 + $0x40] sm:$0xff]
        %v373 = vld [vmem:[%s296 + $0x48] sm:$0xff]
        %v374 = vld [vmem:[%s296 + $0x50] sm:$0xff]
        %v375 = vld [vmem:[%s296 + $0x58] sm:$0xff]
        %v376 = vld [vmem:[%s296 + $0x60] sm:$0xff]
        %v377 = vld [vmem:[%s296 + $0x68] sm:$0xff]
        %v378 = vld [vmem:[%s296 + $0x70] sm:$0xff]
        %v379 = vld [vmem:[%s296 + $0x78] sm:$0xff]
        %v380 = vld [vmem:[%s296 + $0x80] sm:$0xff]
        %v381 = vld [vmem:[%s296 + $0x88] sm:$0xff]
        %v382 = vld [vmem:[%s296 + $0x90] sm:$0xff]
        %v383 = vld [vmem:[%s296 + $0x98] sm:$0xff]
        %v384 = vld [vmem:[%s296 + $0xa0] sm:$0xff]
        %v385 = vld [vmem:[%s296 + $0xa8] sm:$0xff]
        %v386 = vld [vmem:[%s296 + $0xb0] sm:$0xff]
        %v387 = vld [vmem:[%s296 + $0xb8] sm:$0xff]
        %v388 = vld [vmem:[%s296 + $0xc0] sm:$0xff]
        %v389 = vld [vmem:[%s296 + $0xc8] sm:$0xff]
        %v390 = vld [vmem:[%s296 + $0xd0] sm:$0xff]
        %v391 = vld [vmem:[%s296 + $0xd8] sm:$0xff]
        %v392 = vld [vmem:[%s296 + $0xe0] sm:$0xff]
        %v393 = vld [vmem:[%s296 + $0xe8] sm:$0xff]
        %v394 = vld [vmem:[%s296 + $0xf0] sm:$0xff]
        %v395 = vld [vmem:[%s296 + $0xf8] sm:$0xff]
        %v396 = vld [vmem:[#allocation7] sm:$0xff]
        %v397 = vld [vmem:[#allocation7 + $0x8] sm:$0xff]
        %v398 = vld [vmem:[%s4] sm:$0xff]
        %399 = vmatpush.xpose.msra.mxu0 0.0
        %400 = vmatpush.xpose.msra.mxu0 0.0
        %401 = vmatpush.xpose.msra.mxu0 0.0
        %402 = vmatpush.xpose.msra.mxu0 0.0
        %403 = vmatpush.xpose.msra.mxu0 0.0
        %404 = vmatpush.xpose.msra.mxu0 0.0
        %405 = vmatpush.xpose.msra.mxu0 0.0
        %406 = vmatpush.xpose.msra.mxu0 0.0
        %407 = vmatpush.xpose.msra.mxu0 0.0
        %408 = vmatpush.xpose.msra.mxu0 0.0
        %409 = vmatpush.xpose.msra.mxu0 0.0
        %410 = vmatpush.xpose.msra.mxu0 0.0
        %411 = vmatpush.xpose.msra.mxu0 0.0
        %412 = vmatpush.xpose.msra.mxu0 0.0
        %413 = vmatpush.xpose.msra.mxu0 %v397
        %414 = vmatpush.xpose.msra.mxu0 %v396
        %415 = vmatmul.f32.gmra.mxu0 %v364
        %v416 = vpop.f32.mrf.mxu0
        %v417 = vadd.f32 0.0, %v416
        %418 = vmatmul.f32.gmra.mxu0 %v365
        %v419 = vpop.f32.mrf.mxu0
        %v420 = vadd.f32 0.0, %v419
        %421 = vmatmul.f32.gmra.mxu0 %v366
        %v422 = vpop.f32.mrf.mxu0
        %v423 = vadd.f32 0.0, %v422
        %424 = vmatmul.f32.gmra.mxu0 %v367
        %v425 = vpop.f32.mrf.mxu0
        %v426 = vadd.f32 0.0, %v425
        %427 = vmatmul.f32.gmra.mxu0 %v368
        %v428 = vpop.f32.mrf.mxu0
        %v429 = vadd.f32 0.0, %v428
        %430 = vmatmul.f32.gmra.mxu0 %v369
        %v431 = vpop.f32.mrf.mxu0
        %v432 = vadd.f32 0.0, %v431
        %433 = vmatmul.f32.gmra.mxu0 %v370
        %v434 = vpop.f32.mrf.mxu0
        %v435 = vadd.f32 0.0, %v434
        %436 = vmatmul.f32.gmra.mxu0 %v371
        %v437 = vpop.f32.mrf.mxu0
        %v438 = vadd.f32 0.0, %v437
        %439 = vmatmul.f32.gmra.mxu0 %v372
        %v440 = vpop.f32.mrf.mxu0
        %v441 = vadd.f32 0.0, %v440
        %442 = vmatmul.f32.gmra.mxu0 %v373
        %v443 = vpop.f32.mrf.mxu0
        %v444 = vadd.f32 0.0, %v443
        %445 = vmatmul.f32.gmra.mxu0 %v374
        %v446 = vpop.f32.mrf.mxu0
        %v447 = vadd.f32 0.0, %v446
        %448 = vmatmul.f32.gmra.mxu0 %v375
        %v449 = vpop.f32.mrf.mxu0
        %v450 = vadd.f32 0.0, %v449
        %451 = vmatmul.f32.gmra.mxu0 %v376
        %v452 = vpop.f32.mrf.mxu0
        %v453 = vadd.f32 0.0, %v452
        %454 = vmatmul.f32.gmra.mxu0 %v377
        %v455 = vpop.f32.mrf.mxu0
        %v456 = vadd.f32 0.0, %v455
        %457 = vmatmul.f32.gmra.mxu0 %v378
        %v458 = vpop.f32.mrf.mxu0
        %v459 = vadd.f32 0.0, %v458
        %460 = vmatmul.f32.gmra.mxu0 %v379
        %v461 = vpop.f32.mrf.mxu0
        %v462 = vadd.f32 0.0, %v461
        %463 = vmatmul.f32.gmra.mxu0 %v380
        %v464 = vpop.f32.mrf.mxu0
        %v465 = vadd.f32 0.0, %v464
        %466 = vmatmul.f32.gmra.mxu0 %v381
        %v467 = vpop.f32.mrf.mxu0
        %v468 = vadd.f32 0.0, %v467
        %469 = vmatmul.f32.gmra.mxu0 %v382
        %v470 = vpop.f32.mrf.mxu0
        %v471 = vadd.f32 0.0, %v470
        %472 = vmatmul.f32.gmra.mxu0 %v383
        %v473 = vpop.f32.mrf.mxu0
        %v474 = vadd.f32 0.0, %v473
        %475 = vmatmul.f32.gmra.mxu0 %v384
        %v476 = vpop.f32.mrf.mxu0
        %v477 = vadd.f32 0.0, %v476
        %478 = vmatmul.f32.gmra.mxu0 %v385
        %v479 = vpop.f32.mrf.mxu0
        %v480 = vadd.f32 0.0, %v479
        %481 = vmatmul.f32.gmra.mxu0 %v386
        %v482 = vpop.f32.mrf.mxu0
        %v483 = vadd.f32 0.0, %v482
        %484 = vmatmul.f32.gmra.mxu0 %v387
        %v485 = vpop.f32.mrf.mxu0
        %v486 = vadd.f32 0.0, %v485
        %487 = vmatmul.f32.gmra.mxu0 %v388
        %v488 = vpop.f32.mrf.mxu0
        %v489 = vadd.f32 0.0, %v488
        %490 = vmatmul.f32.gmra.mxu0 %v389
        %v491 = vpop.f32.mrf.mxu0
        %v492 = vadd.f32 0.0, %v491
        %493 = vmatmul.f32.gmra.mxu0 %v390
        %v494 = vpop.f32.mrf.mxu0
        %v495 = vadd.f32 0.0, %v494
        %496 = vmatmul.f32.gmra.mxu0 %v391
        %v497 = vpop.f32.mrf.mxu0
        %v498 = vadd.f32 0.0, %v497
        %499 = vmatmul.f32.gmra.mxu0 %v392
        %v500 = vpop.f32.mrf.mxu0
        %v501 = vadd.f32 0.0, %v500
        %502 = vmatmul.f32.gmra.mxu0 %v393
        %v503 = vpop.f32.mrf.mxu0
        %v504 = vadd.f32 0.0, %v503
        %505 = vmatmul.f32.gmra.mxu0 %v394
        %v506 = vpop.f32.mrf.mxu0
        %v507 = vadd.f32 0.0, %v506
        %508 = vmatmul.f32.gmra.mxu0 %v395
        %v509 = vpop.f32.mrf.mxu0
        %v510 = vadd.f32 0.0, %v509
        %511 = vdwg.mxu0
        %v512 = vld [vmem:[%s306] sm:$0x1]
        %v513 = vld [vmem:[%s306 + $0x1] sm:$0x1]
        %v516 = vperm.slane %v512, 0
        %v517 = vperm.slane %v513, 0
        %v520 = vadd.f32 %v417, %v516
        %v521 = vadd.f32 %v420, %v516
        %v522 = vadd.f32 %v423, %v516
        %v523 = vadd.f32 %v426, %v516
        %v524 = vadd.f32 %v429, %v516
        %v525 = vadd.f32 %v432, %v516
        %v526 = vadd.f32 %v435, %v516
        %v527 = vadd.f32 %v438, %v516
        %v528 = vadd.f32 %v441, %v516
        %v529 = vadd.f32 %v444, %v516
        %v530 = vadd.f32 %v447, %v516
        %v531 = vadd.f32 %v450, %v516
        %v532 = vadd.f32 %v453, %v516
        %v533 = vadd.f32 %v456, %v516
        %v534 = vadd.f32 %v459, %v516
        %v535 = vadd.f32 %v462, %v516
        %v536 = vadd.f32 %v465, %v517
        %v537 = vadd.f32 %v468, %v517
        %v538 = vadd.f32 %v471, %v517
        %v539 = vadd.f32 %v474, %v517
        %v540 = vadd.f32 %v477, %v517
        %v541 = vadd.f32 %v480, %v517
        %v542 = vadd.f32 %v483, %v517
        %v543 = vadd.f32 %v486, %v517
        %v544 = vadd.f32 %v489, %v517
        %v545 = vadd.f32 %v492, %v517
        %v546 = vadd.f32 %v495, %v517
        %v547 = vadd.f32 %v498, %v517
        %v548 = vadd.f32 %v501, %v517
        %v549 = vadd.f32 %v504, %v517
        %v550 = vadd.f32 %v507, %v517
        %v551 = vadd.f32 %v510, %v517
        %v552 = vtanh.pop %v520
        %v553 = vtanh.pop %v521
        %v554 = vtanh.pop %v522
        %v555 = vtanh.pop %v523
        %v556 = vtanh.pop %v524
        %v557 = vtanh.pop %v525
        %v558 = vtanh.pop %v526
        %v559 = vtanh.pop %v527
        %v560 = vtanh.pop %v528
        %v561 = vtanh.pop %v529
        %v562 = vtanh.pop %v530
        %v563 = vtanh.pop %v531
        %v564 = vtanh.pop %v532
        %v565 = vtanh.pop %v533
        %v566 = vtanh.pop %v534
        %v567 = vtanh.pop %v535
        %v568 = vtanh.pop %v536
        %v569 = vtanh.pop %v537
        %v570 = vtanh.pop %v538
        %v571 = vtanh.pop %v539
        %v572 = vtanh.pop %v540
        %v573 = vtanh.pop %v541
        %v574 = vtanh.pop %v542
        %v575 = vtanh.pop %v543
        %v576 = vtanh.pop %v544
        %v577 = vtanh.pop %v545
        %v578 = vtanh.pop %v546
        %v579 = vtanh.pop %v547
        %v580 = vtanh.pop %v548
        %v581 = vtanh.pop %v549
        %v582 = vtanh.pop %v550
        %v583 = vtanh.pop %v551
        %vm584 = vcmask 130048
        %v586 = vsel %vm584, %v398, 0
        %v589 = vsel %vm584, %v552, 0
        %v592 = vsel %vm584, %v553, 0
        %v595 = vsel %vm584, %v554, 0
        %v598 = vsel %vm584, %v555, 0
        %v601 = vsel %vm584, %v556, 0
        %v604 = vsel %vm584, %v557, 0
        %v607 = vsel %vm584, %v558, 0
        %v610 = vsel %vm584, %v559, 0
        %v613 = vsel %vm584, %v560, 0
        %v616 = vsel %vm584, %v561, 0
        %v619 = vsel %vm584, %v562, 0
        %v622 = vsel %vm584, %v563, 0
        %v625 = vsel %vm584, %v564, 0
        %v628 = vsel %vm584, %v565, 0
        %v631 = vsel %vm584, %v566, 0
        %v634 = vsel %vm584, %v567, 0
        %636 = vmatpush.xpose.msra.mxu0 %v634
        %637 = vmatpush.xpose.msra.mxu0 %v631
        %638 = vmatpush.xpose.msra.mxu0 %v628
        %639 = vmatpush.xpose.msra.mxu0 %v625
        %640 = vmatpush.xpose.msra.mxu0 %v622
        %641 = vmatpush.xpose.msra.mxu0 %v619
        %642 = vmatpush.xpose.msra.mxu0 %v616
        %643 = vmatpush.xpose.msra.mxu0 %v613
        %644 = vmatpush.xpose.msra.mxu0 %v610
        %645 = vmatpush.xpose.msra.mxu0 %v607
        %646 = vmatpush.xpose.msra.mxu0 %v604
        %647 = vmatpush.xpose.msra.mxu0 %v601
        %648 = vmatpush.xpose.msra.mxu0 %v598
        %649 = vmatpush.xpose.msra.mxu0 %v595
        %650 = vmatpush.xpose.msra.mxu0 %v592
        %651 = vmatpush.xpose.msra.mxu0 %v589
        %652 = vmatmul.f32.gmra.mxu0 %v586
        %v653 = vpop.f32.mrf.mxu0
        %v654 = vadd.f32 0.0, %v653
        %655 = vdwg.mxu0
        %v657 = vsel %vm584, %v568, 0
        %v660 = vsel %vm584, %v569, 0
        %v663 = vsel %vm584, %v570, 0
        %v666 = vsel %vm584, %v571, 0
        %v669 = vsel %vm584, %v572, 0
        %v672 = vsel %vm584, %v573, 0
        %v675 = vsel %vm584, %v574, 0
        %v678 = vsel %vm584, %v575, 0
        %v681 = vsel %vm584, %v576, 0
        %v684 = vsel %vm584, %v577, 0
        %v687 = vsel %vm584, %v578, 0
        %v690 = vsel %vm584, %v579, 0
        %v693 = vsel %vm584, %v580, 0
        %v696 = vsel %vm584, %v581, 0
        %v699 = vsel %vm584, %v582, 0
        %v702 = vsel %vm584, %v583, 0
        %704 = vmatpush.xpose.msra.mxu0 %v702
        %705 = vmatpush.xpose.msra.mxu0 %v699
        %706 = vmatpush.xpose.msra.mxu0 %v696
        %707 = vmatpush.xpose.msra.mxu0 %v693
        %708 = vmatpush.xpose.msra.mxu0 %v690
        %709 = vmatpush.xpose.msra.mxu0 %v687
        %710 = vmatpush.xpose.msra.mxu0 %v684
        %711 = vmatpush.xpose.msra.mxu0 %v681
        %712 = vmatpush.xpose.msra.mxu0 %v678
        %713 = vmatpush.xpose.msra.mxu0 %v675
        %714 = vmatpush.xpose.msra.mxu0 %v672
        %715 = vmatpush.xpose.msra.mxu0 %v669
        %716 = vmatpush.xpose.msra.mxu0 %v666
        %717 = vmatpush.xpose.msra.mxu0 %v663
        %718 = vmatpush.xpose.msra.mxu0 %v660
        %719 = vmatpush.xpose.msra.mxu0 %v657
        %720 = vmatmul.f32.gmra.mxu0 %v586
        %v721 = vpop.f32.mrf.mxu0
        %v722 = vadd.f32 0.0, %v721
        %723 = vdwg.mxu0
        %v724 = vlaneseq
        %v725 = vand.u32 %v724, 127
        %v726 = vld [vmem:[%s358] sm:$0x1]
        %v727 = vld [vmem:[%s358 + $0x1] sm:$0x1]
        %v728 = vperm.slane %v726, 0
        %v729 = vperm.slane %v727, 0
        %730 = vset.pattern.permute.xlu0 0
        %731 = vperm.xlu0 %730, %v728
        %v732 = vpop.permute.xlu0 %731
        %733 = vset.pattern.permute.xlu0 0
        %734 = vperm.xlu0 %733, %v729
        %v735 = vpop.permute.xlu0 %734
        %vm736 = vcmp.lt.s32.totalorder %v725, %v732
        %vm737 = vcmp.lt.s32.totalorder %v725, %v735
        %v738 = vsel %vm736, %v654, -1e+30
        %v739 = vsel %vm737, %v722, -1e+30
        %740 = vmax.xlane.f32.xlu0 %v738
        %v741 = vpop.xlane.xlu0 %740
        %742 = vmax.xlane.f32.xlu0 %v739
        %v743 = vpop.xlane.xlu0 %742
        %v744 = vsub.f32 %v738, %v741
        %v745 = vsub.f32 %v739, %v743
        %v746 = vmul.f32 %v744, 1.442695
        %v747 = vpow.pop %v746
        %v748 = vmul.f32 %v745, 1.442695
        %v749 = vpow.pop %v748
        %v750 = vsel %vm736, %v747, 0.0
        %v751 = vsel %vm737, %v749, 0.0
        %752 = vadd.xlane.f32.xlu0 %v750
        %v753 = vpop.xlane.xlu0 %752
        %754 = vadd.xlane.f32.xlu0 %v751
        %v755 = vpop.xlane.xlu0 %754
        %v756 = vmax.f32 %v753, 1e-30
        %v757 = vmax.f32 %v755, 1e-30
        %v758 = vrcp.pop %v756
        %v759 = vrcp.pop %v757
        %v760 = vmul.f32 %v750, %v758
        %v761 = vmul.f32 %v751, %v759
        %762 = vmatpush.msra.mxu0 %v379
        %763 = vmatpush.msra.mxu0 %v378
        %764 = vmatpush.msra.mxu0 %v377
        %765 = vmatpush.msra.mxu0 %v376
        %766 = vmatpush.msra.mxu0 %v375
        %767 = vmatpush.msra.mxu0 %v374
        %768 = vmatpush.msra.mxu0 %v373
        %769 = vmatpush.msra.mxu0 %v372
        %770 = vmatpush.msra.mxu0 %v371
        %771 = vmatpush.msra.mxu0 %v370
        %772 = vmatpush.msra.mxu0 %v369
        %773 = vmatpush.msra.mxu0 %v368
        %774 = vmatpush.msra.mxu0 %v367
        %775 = vmatpush.msra.mxu0 %v366
        %776 = vmatpush.msra.mxu0 %v365
        %777 = vmatpush.msra.mxu0 %v364
        %778 = vmatmul.f32.gmra.mxu0 %v760
        %v779 = vpop.f32.mrf.mxu0
        %v780 = vadd.f32 0.0, %v779
        %781 = vdwg.mxu0
        %782 = vmatpush.msra.mxu0 %v395
        %783 = vmatpush.msra.mxu0 %v394
        %784 = vmatpush.msra.mxu0 %v393
        %785 = vmatpush.msra.mxu0 %v392
        %786 = vmatpush.msra.mxu0 %v391
        %787 = vmatpush.msra.mxu0 %v390
        %788 = vmatpush.msra.mxu0 %v389
        %789 = vmatpush.msra.mxu0 %v388
        %790 = vmatpush.msra.mxu0 %v387
        %791 = vmatpush.msra.mxu0 %v386
        %792 = vmatpush.msra.mxu0 %v385
        %793 = vmatpush.msra.mxu0 %v384
        %794 = vmatpush.msra.mxu0 %v383
        %795 = vmatpush.msra.mxu0 %v382
        %796 = vmatpush.msra.mxu0 %v381
        %797 = vmatpush.msra.mxu0 %v380
        %798 = vmatmul.f32.gmra.mxu0 %v761
        %v799 = vpop.f32.mrf.mxu0
        %v800 = vadd.f32 0.0, %v799
        %801 = vdwg.mxu0
        %802 = vst [vmem:[%s347] sm:$0xff] %v780
        %803 = vst [vmem:[%s347 + $0x8] sm:$0xff] %v800
        %804 = vst [vmem:[%s354] sm:$0xff] %v760
        %805 = vst [vmem:[%s354 + $0x8] sm:$0xff] %v761
        %s806 = sand.u32 %s158, 1
        %s807 = scalar_lea.sflag [#allocation4], %s806
        %s808 = sand.u32 %s158, 1
        %s809 = smul.addr %s808, 16
        %s810 = scalar_lea.vmem [#allocation8], %s809
        %s811 = sand.u32 %s184, 1
        %s812 = scalar_lea.sflag [#allocation10], %s811
        %s813 = sand.u32 %s184, 1
        %s814 = smul.addr %s813, 16
        %s815 = scalar_lea.vmem [#allocation9], %s814
        // Predicated region
        $region53: #{tpu_custom_call.1} parent=39 // pred_check
          %p816 = pneg %p168
        $region54: #{tpu_custom_call.1} parent=39 // pred_check_branch
          %818 = sbr.rel (%p816) target = $region56
        $region55: #{tpu_custom_call.1} parent=39 // pred_region
          %s819 = smul.u32 2, %s30
          %821 = vsyncadd %s807, 0
          %s822 = smul.addr %s819, 8
          %s823 = scalar_lea.hbm %s5, %s822
          %s824 = sshll.u32 %s810, 4
          %s825 = int_to_ptr.vmem [resolvable:$true] %s824
          %s826 = sshll.u32 %s823, 4
          %s827 = int_to_ptr.hbm [resolvable:$true] %s826
          %832 = dma.vmem_to_hbm [thread:$0]  %s825, 256, %s827, %s807, 128, 128, 8
        $region56: #{tpu_custom_call.1} parent=39 // pred_fallthru
          _
        // Predicated region
        $region57: #{tpu_custom_call.1} parent=39 // pred_check
          %p833 = pneg %p194
        $region58: #{tpu_custom_call.1} parent=39 // pred_check_branch
          %835 = sbr.rel (%p833) target = $region60
        $region59: #{tpu_custom_call.1} parent=39 // pred_region
          %s836 = smul.u32 2, %s30
          %838 = vsyncadd %s812, 0
          %s839 = smul.addr %s836, 8
          %s840 = scalar_lea.hbm %s6, %s839
          %s841 = sshll.u32 %s815, 4
          %s842 = int_to_ptr.vmem [resolvable:$true] %s841
          %s843 = sshll.u32 %s840, 4
          %s844 = int_to_ptr.hbm [resolvable:$true] %s843
          %849 = dma.vmem_to_hbm [thread:$0]  %s842, 256, %s844, %s812, 128, 128, 8
        $region60: #{tpu_custom_call.1} parent=39 // pred_fallthru
          _
      $region40: #{tpu_custom_call.1} parent=5 // pred_fallthru
        _
      %p850 = scmp.le.s32.totalorder 2, %s25
      // Predicated region
      $region61: #{tpu_custom_call.1} parent=5 // pred_check
        %p851 = pneg %p850
      $region62: #{tpu_custom_call.1} parent=5 // pred_check_branch
        %853 = sbr.rel (%p851) target = $region64
      $region63: #{tpu_custom_call.1} parent=5 // pred_region
        %s854 = ssub.s32 %s25, 2
        // Predicated region
        $region65: #{tpu_custom_call.1} parent=63 // pred_check
          %p855 = pneg %p174
        $region66: #{tpu_custom_call.1} parent=63 // pred_check_branch
          %857 = sbr.rel (%p855) target = $region68
        $region67: #{tpu_custom_call.1} parent=63 // pred_region
          %s858 = sand.u32 %s159, 1
          %s859 = scalar_lea.sflag [#allocation4], %s858
          %s860 = sand.u32 %s159, 1
          %s861 = smul.addr %s860, 16
          %s862 = scalar_lea.vmem [#allocation8], %s861
          %864 = dma.done %s859, 256
        $region68: #{tpu_custom_call.1} parent=63 // pred_fallthru
          _
        // Predicated region
        $region69: #{tpu_custom_call.1} parent=63 // pred_check
          %p865 = pneg %p200
        $region70: #{tpu_custom_call.1} parent=63 // pred_check_branch
          %867 = sbr.rel (%p865) target = $region72
        $region71: #{tpu_custom_call.1} parent=63 // pred_region
          %s868 = sand.u32 %s185, 1
          %s869 = scalar_lea.sflag [#allocation10], %s868
          %s870 = sand.u32 %s185, 1
          %s871 = smul.addr %s870, 16
          %s872 = scalar_lea.vmem [#allocation9], %s871
          %874 = dma.done %s869, 256
        $region72: #{tpu_custom_call.1} parent=63 // pred_fallthru
          _
      $region64: #{tpu_custom_call.1} parent=5 // pred_fallthru
        _
    $region6: #{tpu_custom_call.1} parent=1 // loop_footer
      %s29 = sadd.s32 1, %s25
    $region7: #{tpu_custom_call.1} parent=1 // loop_footer_branch
      %24 = sbr.rel target = $region3
    $region8: #{tpu_custom_call.1} parent=1 // loop_exit
      _
    %875 = vsyncpa [#allocation3], 1
    %s876 = scalar_lea.sflag [#allocation3], 1
    %877 = vsyncpa %s876, 1
    %878 = vsyncpa [#allocation6], 1
    %s879 = scalar_lea.sflag [#allocation6], 1
    %880 = vsyncpa %s879, 1
    %881 = vsyncpa [#allocation4], 1
    %s882 = scalar_lea.sflag [#allocation4], 1
    %883 = vsyncpa %s882, 1
    %884 = vsyncpa [#allocation10], 1
    %s885 = scalar_lea.sflag [#allocation10], 1
    %886 = vsyncpa %s885, 1

</llo_original>
